<compile_context>
chip_gen: v7x
topology: tpu7x:2x2x1
jax: 0.10.0
libtpu: 0.0.40
codegen_flags: <defaults>
</compile_context>

<pallas_src>
import jax
import jax.numpy as jnp
from jax.experimental import pallas as pl
from jax.experimental.pallas import tpu as pltpu

BN_EPS = 1e-5
LANE = 128          # TPU lane width
SUBLANE = 8         # sublane width; K is padded to a multiple of this
MAX_M_TILE = 2048   # largest streamed lane-tile width


# ------------------------------ Pallas kernels ------------------------------

def _conv_bn_relu_kernel(p_ref, w_ref, g_ref, b_ref, o_ref, sum_ref, ssq_ref):
    """Grid (c, m): o_ref[:, m-tile] = W^T @ P^T_tile (MXU, f32) written straight
    into the grid-invariant output block; per-tile sum / sumsq stream into (C,1)
    accumulators.  Last m step: batch-stat BatchNorm + ReLU in place on o_ref.
    conv bias omitted (a per-channel constant cancels in batch-stat BN)."""
    m = pl.program_id(1)
    mt = p_ref.shape[1]                       # static lane-tile width
    col = m * mt
    if mt % LANE == 0:
        col = pl.multiple_of(col, LANE)

    @pl.when(m == 0)
    def _():
        sum_ref[...] = jnp.zeros_like(sum_ref)
        ssq_ref[...] = jnp.zeros_like(ssq_ref)

    y_t = jnp.dot(w_ref[...], p_ref[...], preferred_element_type=jnp.float32)
    o_ref[:, pl.ds(col, mt)] = y_t
    sum_ref[...] += jnp.sum(y_t, axis=1, keepdims=True)
    ssq_ref[...] += jnp.sum(y_t * y_t, axis=1, keepdims=True)

    @pl.when(m == pl.num_programs(1) - 1)
    def _():
        inv_m = 1.0 / (mt * pl.num_programs(1))
        mu = sum_ref[...] * inv_m
        var = ssq_ref[...] * inv_m - mu * mu          # biased batch variance
        scale = jax.lax.rsqrt(var + BN_EPS) * g_ref[...]
        shift = b_ref[...] - mu * scale
        o_ref[...] = jnp.maximum(o_ref[...] * scale + shift, 0.0)


def _conv_bn_residual_relu_kernel(p2_ref, p3_ref, w2_ref, w3_ref, rb_ref,
                                  g_ref, b_ref, o_ref, y_acc, sum_ref, ssq_ref):
    """Grid (c, m): main-path conv2 tile -> y_acc (+ streamed sum/sumsq),
    shortcut conv3 tile (alpha pre-folded into weights) -> o_ref.
    Last m step: bn2 (batch stats) + shortcut + folded (alpha*b3+beta) + ReLU."""
    m = pl.program_id(1)
    mt = p2_ref.shape[1]
    col = m * mt
    if mt % LANE == 0:
        col = pl.multiple_of(col, LANE)

    @pl.when(m == 0)
    def _():
        sum_ref[...] = jnp.zeros_like(sum_ref)
        ssq_ref[...] = jnp.zeros_like(ssq_ref)

    y_t = jnp.dot(w2_ref[...], p2_ref[...], preferred_element_type=jnp.float32)
    y_acc[:, pl.ds(col, mt)] = y_t
    sum_ref[...] += jnp.sum(y_t, axis=1, keepdims=True)
    ssq_ref[...] += jnp.sum(y_t * y_t, axis=1, keepdims=True)
    # shortcut tiles land directly in the resident output block (no x_acc slab)
    o_ref[:, pl.ds(col, mt)] = jnp.dot(
        w3_ref[...], p3_ref[...], preferred_element_type=jnp.float32)

    @pl.when(m == pl.num_programs(1) - 1)
    def _():
        inv_m = 1.0 / (mt * pl.num_programs(1))
        mu = sum_ref[...] * inv_m
        var = ssq_ref[...] * inv_m - mu * mu
        scale = jax.lax.rsqrt(var + BN_EPS) * g_ref[...]
        shift = b_ref[...] - mu * scale + rb_ref[...]   # bn shift + alpha*b3 + beta
        o_ref[...] = jnp.maximum(y_acc[...] * scale + shift + o_ref[...], 0.0)


# ------------------------------ tiling helpers ------------------------------

def _m_tiling(M):
    """Largest lane-tile: full M if small, else biggest multiple of 128 dividing M."""
    if M <= MAX_M_TILE or M % LANE != 0:
        return M, 1
    mt = MAX_M_TILE - (MAX_M_TILE % LANE)
    while M % mt != 0:
        mt -= LANE
    return mt, M // mt


def _c_tiling(C):
    """Output-channel blocks (independent for conv + batch-stat BN)."""
    if C % LANE == 0:
        return LANE, C // LANE
    return C, 1


def _vmem_limit(*byte_counts):
    est = sum(byte_counts) + (2 << 20)
    return int(min(max(2 * est, 16 << 20), 56 << 20))


# ------------------------------ Pallas wrappers ------------------------------

def conv_bn_relu_T(pT, wT, gamma, beta):
    """relu(batchnorm(wT @ pT)) in transposed (C, M) layout, lane-dense."""
    Kp, M = pT.shape
    C = wT.shape[0]
    c_blk, c_steps = _c_tiling(C)
    mt, m_steps = _m_tiling(M)
    vlim = _vmem_limit(2 * c_blk * M * 4,        # resident/double-buffered output
                       2 * Kp * mt * 4,          # streamed patch tiles
                       2 * c_blk * Kp * 4)       # weights
    return pl.pallas_call(
        _conv_bn_relu_kernel,
        out_shape=jax.ShapeDtypeStruct((C, M), jnp.float32),
        grid=(c_steps, m_steps),
        in_specs=[
            pl.BlockSpec((Kp, mt), lambda c, m: (0, m)),      # streamed patch tiles
            pl.BlockSpec((c_blk, Kp), lambda c, m: (c, 0)),   # resident weights
            pl.BlockSpec((c_blk, 1), lambda c, m: (c, 0)),
            pl.BlockSpec((c_blk, 1), lambda c, m: (c, 0)),
        ],
        out_specs=pl.BlockSpec((c_blk, M), lambda c, m: (c, 0)),  # BN needs full M
        scratch_shapes=[pltpu.VMEM((c_blk, 1), jnp.float32),      # streaming sum
                        pltpu.VMEM((c_blk, 1), jnp.float32)],     # streaming sumsq
        compiler_params=pltpu.CompilerParams(
            dimension_semantics=("parallel", "arbitrary"),
            vmem_limit_bytes=vlim),
    )(pT, wT, gamma.reshape(C, 1), beta.reshape(C, 1))


def conv_bn_residual_relu_T(pT2, pT3, w2T, w3aT, rbias, gamma, beta):
    """relu(batchnorm(w2T @ pT2) + w3aT @ pT3 + rbias), (C, M) lane-dense.
    alpha is pre-folded into w3aT, (alpha*b3 + beta) into rbias."""
    K2p, M = pT2.shape
    K3p = pT3.shape[0]
    C = w2T.shape[0]
    c_blk, c_steps = _c_tiling(C)
    mt, m_steps = _m_tiling(M)
    vlim = _vmem_limit(3 * c_blk * M * 4,                 # out (x2) + y_acc slab
                       2 * (K2p + K3p) * mt * 4,          # streamed patch tiles
                       2 * c_blk * (K2p + K3p) * 4)       # weights
    return pl.pallas_call(
        _conv_bn_residual_relu_kernel,
        out_shape=jax.ShapeDtypeStruct((C, M), jnp.float32),
        grid=(c_steps, m_steps),
        in_specs=[
            pl.BlockSpec((K2p, mt), lambda c, m: (0, m)),
            pl.BlockSpec((K3p, mt), lambda c, m: (0, m)),
            pl.BlockSpec((c_blk, K2p), lambda c, m: (c, 0)),
            pl.BlockSpec((c_blk, K3p), lambda c, m: (c, 0)),
            pl.BlockSpec((c_blk, 1), lambda c, m: (c, 0)),
            pl.BlockSpec((c_blk, 1), lambda c, m: (c, 0)),
            pl.BlockSpec((c_blk, 1), lambda c, m: (c, 0)),
        ],
        out_specs=pl.BlockSpec((c_blk, M), lambda c, m: (c, 0)),
        scratch_shapes=[pltpu.VMEM((c_blk, M), jnp.float32),   # pre-BN conv2 slab
                        pltpu.VMEM((c_blk, 1), jnp.float32),
                        pltpu.VMEM((c_blk, 1), jnp.float32)],
        compiler_params=pltpu.CompilerParams(
            dimension_semantics=("parallel", "arbitrary"),
            vmem_limit_bytes=vlim),
    )(pT2, pT3, w2T, w3aT, rbias.reshape(C, 1),
      gamma.reshape(C, 1), beta.reshape(C, 1))


# ------------------------------ conv glue (JAX) ------------------------------

def _im2col_T(x_nhwc, kh, kw, stride, pad):
    """Transposed patch matrix: (kh*kw*Cin, N*Ho*Wo); K ordered (i, j, cin)."""
    N, H, W, Cin = x_nhwc.shape
    xp = jnp.pad(x_nhwc, ((0, 0), (pad, pad), (pad, pad), (0, 0)))
    Ho = (H + 2 * pad - kh) // stride + 1
    Wo = (W + 2 * pad - kw) // stride + 1
    rows = []
    for i in range(kh):
        for j in range(kw):
            sl = xp[:, i:i + stride * Ho:stride, j:j + stride * Wo:stride, :]
            rows.append(jnp.transpose(sl, (3, 0, 1, 2)).reshape(Cin, N * Ho * Wo))
    return jnp.concatenate(rows, axis=0), (N, Ho, Wo)


def _pad_k_rows(a):
    k = a.shape[0]
    kp = ((k + SUBLANE - 1) // SUBLANE) * SUBLANE
    return a if kp == k else jnp.pad(a, ((0, kp - k), (0, 0)))


def _pad_k_cols(a):
    k = a.shape[1]
    kp = ((k + SUBLANE - 1) // SUBLANE) * SUBLANE
    return a if kp == k else jnp.pad(a, ((0, 0), (0, kp - k)))


def _w_T(w_oihw):
    """(O, I, KH, KW) -> (O, KH*KW*I) with K ordered (i, j, cin), matching _im2col_T."""
    O = w_oihw.shape[0]
    return jnp.transpose(w_oihw, (0, 2, 3, 1)).reshape(O, -1)


# ------------------------------ Residual block -------------------------------

def residual_forward(x_nchw, params, strides):
    x = jnp.transpose(x_nchw, (0, 2, 3, 1))                # NCHW -> NHWC (once)
    Cout = params["w1"].shape[0]
    alpha = params["alpha"].reshape(())
    beta = params["beta"].reshape(())

    # stage 1: conv1 (3x3, pad 1, stride s) + bn1 + relu  -- one fused kernel.
    # conv1's bias is dropped: a per-channel constant cancels in batch-stat BN.
    pT1, (N, Ho, Wo) = _im2col_T(x, 3, 3, strides, 1)
    y1T = conv_bn_relu_T(_pad_k_rows(pT1), _pad_k_cols(_w_T(params["w1"])),
                         params["g1"], params["bb1"])      # (Cout, M) lane-dense

    # back to NHWC for conv2's patch extraction (cheap glue at these sizes).
    y1 = jnp.transpose(y1T.reshape(Cout, N, Ho, Wo), (1, 2, 3, 0))

    # stage 2: conv2 (3x3, pad 1) + conv3 (2x2, stride s) + bn2
    #          + residual (x*alpha + beta) + relu          -- one fused kernel.
    # alpha folded into w3, (alpha*b3 + beta) into a per-channel epilogue bias.
    pT2, _ = _im2col_T(y1, 3, 3, 1, 1)
    pT3, _ = _im2col_T(x, 2, 2, strides, 0)
    w3a = params["w3"] * alpha
    rbias = alpha * params["b3"] + beta
    outT = conv_bn_residual_relu_T(
        _pad_k_rows(pT2), _pad_k_rows(pT3),
        _pad_k_cols(_w_T(params["w2"])), _pad_k_cols(_w_T(w3a)),
        rbias, params["g2"], params["bb2"])                 # (Cout, M)

    return jnp.transpose(outT.reshape(Cout, N, Ho, Wo), (1, 0, 2, 3))   # NCHW


# ------------------------------- JAX reference --------------------------------

def _ref_conv(x, w, b, stride, pad):
    y = jax.lax.conv_general_dilated(
        x, w, (stride, stride), [(pad, pad), (pad, pad)],
        dimension_numbers=("NCHW", "OIHW", "NCHW"),
    )
    return y + b[None, :, None, None]


def _ref_bn(x, g, b):
    m = jnp.mean(x, axis=(0, 2, 3), keepdims=True)
    v = jnp.mean((x - m) ** 2, axis=(0, 2, 3), keepdims=True)
    return (x - m) * jax.lax.rsqrt(v + BN_EPS) * g[None, :, None, None] \
        + b[None, :, None, None]


def residual_reference(x, p, strides):
    y = jax.nn.relu(_ref_bn(_ref_conv(x, p["w1"], p["b1"], strides, 1), p["g1"], p["bb1"]))
    y = _ref_bn(_ref_conv(y, p["w2"], p["b2"], 1, 1), p["g2"], p["bb2"])
    xs = _ref_conv(x, p["w3"], p["b3"], strides, 0)
    return jax.nn.relu(y + xs * p["alpha"] + p["beta"])


# ----------------------------------- main -------------------------------------

if __name__ == "__main__":
    # Residual(input_channels=4, num_channels=8, use_1x1conv=True, strides=2)
    Cin, Cout, strides = 4, 8, 2
    N, H, W = 4, 16, 16          # M = N*(H/2)*(W/2) = 256 -> one 256-lane tile

    key = jax.random.PRNGKey(0)
    ks = jax.random.split(key, 13)
    params = {
        "w1": 0.1 * jax.random.normal(ks[0], (Cout, Cin, 3, 3), jnp.float32),
        "b1": 0.1 * jax.random.normal(ks[1], (Cout,), jnp.float32),
        "w2": 0.1 * jax.random.normal(ks[2], (Cout, Cout, 3, 3), jnp.float32),
        "b2": 0.1 * jax.random.normal(ks[3], (Cout,), jnp.float32),
        "w3": 0.1 * jax.random.normal(ks[4], (Cout, Cin, 2, 2), jnp.float32),
        "b3": 0.1 * jax.random.normal(ks[5], (Cout,), jnp.float32),
        "g1": 1.0 + 0.1 * jax.random.normal(ks[6], (Cout,), jnp.float32),
        "bb1": 0.1 * jax.random.normal(ks[7], (Cout,), jnp.float32),
        "g2": 1.0 + 0.1 * jax.random.normal(ks[8], (Cout,), jnp.float32),
        "bb2": 0.1 * jax.random.normal(ks[9], (Cout,), jnp.float32),
        # nn.Parameter(torch.ones(1)) / torch.zeros(1); perturbed here so the
        # alpha/beta folding path is actually exercised by the check.
        "alpha": 1.0 + 0.1 * jax.random.normal(ks[10], (1,), jnp.float32),
        "beta": 0.1 * jax.random.normal(ks[11], (1,), jnp.float32),
    }

    x = jax.random.uniform(ks[12], (N, Cin, H, W), jnp.float32)  # like torch.rand

    out = jax.block_until_ready(residual_forward(x, params, strides))
    ref = jax.block_until_ready(residual_reference(x, params, strides))

    assert out.shape == (N, Cout, H // strides, W // strides), out.shape
    assert jnp.allclose(out, ref, rtol=1e-3, atol=1e-3), float(jnp.max(jnp.abs(out - ref)))
    print("KERNEL_OK")
</pallas_src>

<mosaic_0001>
module attributes {stable_mosaic.version = 11 : i64} {
  func.func @_conv_bn_relu_kernel(%arg0: i32, %arg1: i32, %arg2: memref<40x256xf32, #tpu.memory_space<vmem>>, %arg3: memref<8x40xf32, #tpu.memory_space<vmem>>, %arg4: memref<8x1xf32, #tpu.memory_space<vmem>>, %arg5: memref<8x1xf32, #tpu.memory_space<vmem>>, %arg6: memref<8x256xf32, #tpu.memory_space<vmem>>, %arg7: memref<8x1xf32, #tpu.memory_space<vmem>>, %arg8: memref<8x1xf32, #tpu.memory_space<vmem>>) attributes {dimension_semantics = [#tpu.dimension_semantics<parallel>, #tpu.dimension_semantics<arbitrary>], iteration_bounds = array<i64: 1, 1>, scalar_prefetch = 0 : i64, scratch_operands = 2 : i64, tpu.core_type = #tpu.core_type<tc>, window_params = [{transform_indices = @transform_0, window_bounds = array<i64: 40, 256>}, {transform_indices = @transform_1, window_bounds = array<i64: 8, 40>}, {transform_indices = @transform_2, window_bounds = array<i64: 8, 1>}, {transform_indices = @transform_3, window_bounds = array<i64: 8, 1>}, {transform_indices = @transform_4, window_bounds = array<i64: 8, 256>}]} {
    %c256_i32 = arith.constant 256 : i32
    %0 = arith.muli %arg1, %c256_i32 : i32
    %1 = tpu.assume_multiple %0, 128 : i32
    %c0_i32 = arith.constant 0 : i32
    %2 = arith.cmpi eq, %arg1, %c0_i32 : i32
    %3 = arith.extui %2 : i1 to i32
    %c0_i32_0 = arith.constant 0 : i32
    %4 = arith.cmpi ne, %3, %c0_i32_0 : i32
    scf.if %4 {
      %cst_17 = arith.constant 0.000000e+00 : f32
      %24 = vector.broadcast %cst_17 : f32 to vector<8x1xf32>
      %c0_18 = arith.constant 0 : index
      %c0_19 = arith.constant 0 : index
      %25 = vector.load %arg7[%c0_18, %c0_19] : memref<8x1xf32, #tpu.memory_space<vmem>>, vector<8x1xf32>
      tpu.vector_store %arg7[%c0_18, %c0_19], %24 {strides = array<i32>} : memref<8x1xf32, #tpu.memory_space<vmem>>, vector<8x1xf32>,
      %cst_20 = arith.constant 0.000000e+00 : f32
      %26 = vector.broadcast %cst_20 : f32 to vector<8x1xf32>
      %c0_21 = arith.constant 0 : index
      %c0_22 = arith.constant 0 : index
      %27 = vector.load %arg8[%c0_21, %c0_22] : memref<8x1xf32, #tpu.memory_space<vmem>>, vector<8x1xf32>
      tpu.vector_store %arg8[%c0_21, %c0_22], %26 {strides = array<i32>} : memref<8x1xf32, #tpu.memory_space<vmem>>, vector<8x1xf32>,
    } else {
    }
    %c0 = arith.constant 0 : index
    %c0_1 = arith.constant 0 : index
    %5 = vector.load %arg3[%c0, %c0_1] : memref<8x40xf32, #tpu.memory_space<vmem>>, vector<8x40xf32>
    %c0_2 = arith.constant 0 : index
    %c0_3 = arith.constant 0 : index
    %6 = vector.load %arg2[%c0_2, %c0_3] : memref<40x256xf32, #tpu.memory_space<vmem>>, vector<40x256xf32>
    %cst = arith.constant dense<0.000000e+00> : vector<8x256xf32>
    %7 = tpu.matmul %5, %6, %cst {dimension_numbers = #tpu.dot_dimension_numbers<[1], [0], [0], [1], [0, 0, 1, 1], [], []>} : vector<8x40xf32>, vector<40x256xf32>, vector<8x256xf32> -> vector<8x256xf32>
    %c0_4 = arith.constant 0 : index
    %8 = arith.index_cast %1 : i32 to index
    %9 = vector.load %arg6[%c0_4, %8] : memref<8x256xf32, #tpu.memory_space<vmem>>, vector<8x256xf32>
    tpu.vector_store %arg6[%c0_4, %8], %7 {strides = array<i32>} : memref<8x256xf32, #tpu.memory_space<vmem>>, vector<8x256xf32>,
    %c0_5 = arith.constant 0 : index
    %c0_6 = arith.constant 0 : index
    %10 = vector.load %arg7[%c0_5, %c0_6] : memref<8x1xf32, #tpu.memory_space<vmem>>, vector<8x1xf32>
    %cst_7 = arith.constant dense<0.000000e+00> : vector<8xf32>
    %11 = vector.multi_reduction <add>, %7, %cst_7 [1] : vector<8x256xf32> to vector<8xf32>
    %12 = vector.shape_cast %11 : vector<8xf32> to vector<8x1xf32>
    %13 = arith.addf %10, %12 : vector<8x1xf32>
    %c0_8 = arith.constant 0 : index
    %c0_9 = arith.constant 0 : index
    %14 = vector.load %arg7[%c0_8, %c0_9] : memref<8x1xf32, #tpu.memory_space<vmem>>, vector<8x1xf32>
    tpu.vector_store %arg7[%c0_8, %c0_9], %13 {strides = array<i32>} : memref<8x1xf32, #tpu.memory_space<vmem>>, vector<8x1xf32>,
    %c0_10 = arith.constant 0 : index
    %c0_11 = arith.constant 0 : index
    %15 = vector.load %arg8[%c0_10, %c0_11] : memref<8x1xf32, #tpu.memory_space<vmem>>, vector<8x1xf32>
    %16 = arith.mulf %7, %7 : vector<8x256xf32>
    %cst_12 = arith.constant dense<0.000000e+00> : vector<8xf32>
    %17 = vector.multi_reduction <add>, %16, %cst_12 [1] : vector<8x256xf32> to vector<8xf32>
    %18 = vector.shape_cast %17 : vector<8xf32> to vector<8x1xf32>
    %19 = arith.addf %15, %18 : vector<8x1xf32>
    %c0_13 = arith.constant 0 : index
    %c0_14 = arith.constant 0 : index
    %20 = vector.load %arg8[%c0_13, %c0_14] : memref<8x1xf32, #tpu.memory_space<vmem>>, vector<8x1xf32>
    tpu.vector_store %arg8[%c0_13, %c0_14], %19 {strides = array<i32>} : memref<8x1xf32, #tpu.memory_space<vmem>>, vector<8x1xf32>,
    %c0_i32_15 = arith.constant 0 : i32
    %21 = arith.cmpi eq, %arg1, %c0_i32_15 : i32
    %22 = arith.extui %21 : i1 to i32
    %c0_i32_16 = arith.constant 0 : i32
    %23 = arith.cmpi ne, %22, %c0_i32_16 : i32
    scf.if %23 {
      %c0_17 = arith.constant 0 : index
      %c0_18 = arith.constant 0 : index
      %24 = vector.load %arg7[%c0_17, %c0_18] : memref<8x1xf32, #tpu.memory_space<vmem>>, vector<8x1xf32>
      %cst_19 = arith.constant 3.906250e-03 : f32
      %25 = vector.broadcast %cst_19 : f32 to vector<8x1xf32>
      %26 = arith.mulf %24, %25 : vector<8x1xf32>
      %c0_20 = arith.constant 0 : index
      %c0_21 = arith.constant 0 : index
      %27 = vector.load %arg8[%c0_20, %c0_21] : memref<8x1xf32, #tpu.memory_space<vmem>>, vector<8x1xf32>
      %cst_22 = arith.constant 3.906250e-03 : f32
      %28 = vector.broadcast %cst_22 : f32 to vector<8x1xf32>
      %29 = arith.mulf %27, %28 : vector<8x1xf32>
      %30 = arith.mulf %26, %26 : vector<8x1xf32>
      %31 = arith.subf %29, %30 : vector<8x1xf32>
      %cst_23 = arith.constant 9.99999974E-6 : f32
      %32 = vector.broadcast %cst_23 : f32 to vector<8x1xf32>
      %33 = arith.addf %31, %32 : vector<8x1xf32>
      %34 = math.rsqrt %33 : vector<8x1xf32>
      %c0_24 = arith.constant 0 : index
      %c0_25 = arith.constant 0 : index
      %35 = vector.load %arg4[%c0_24, %c0_25] : memref<8x1xf32, #tpu.memory_space<vmem>>, vector<8x1xf32>
      %36 = arith.mulf %34, %35 : vector<8x1xf32>
      %c0_26 = arith.constant 0 : index
      %c0_27 = arith.constant 0 : index
      %37 = vector.load %arg5[%c0_26, %c0_27] : memref<8x1xf32, #tpu.memory_space<vmem>>, vector<8x1xf32>
      %38 = arith.mulf %26, %36 : vector<8x1xf32>
      %39 = arith.subf %37, %38 : vector<8x1xf32>
      %c0_28 = arith.constant 0 : index
      %c0_29 = arith.constant 0 : index
      %40 = vector.load %arg6[%c0_28, %c0_29] : memref<8x256xf32, #tpu.memory_space<vmem>>, vector<8x256xf32>
      %41 = vector.broadcast %36 : vector<8x1xf32> to vector<8x256xf32>
      %42 = arith.mulf %40, %41 : vector<8x256xf32>
      %43 = vector.broadcast %39 : vector<8x1xf32> to vector<8x256xf32>
      %44 = arith.addf %42, %43 : vector<8x256xf32>
      %cst_30 = arith.constant 0.000000e+00 : f32
      %45 = vector.broadcast %cst_30 : f32 to vector<8x256xf32>
      %46 = arith.maximumf %44, %45 : vector<8x256xf32>
      %c0_31 = arith.constant 0 : index
      %c0_32 = arith.constant 0 : index
      %47 = vector.load %arg6[%c0_31, %c0_32] : memref<8x256xf32, #tpu.memory_space<vmem>>, vector<8x256xf32>
      tpu.vector_store %arg6[%c0_31, %c0_32], %46 {strides = array<i32>} : memref<8x256xf32, #tpu.memory_space<vmem>>, vector<8x256xf32>,
    } else {
    }
    return
  }
  func.func @transform_0(%arg0: i32, %arg1: i32) -> (i32, i32) {
    %c0_i32 = arith.constant 0 : i32
    %c0_i32_0 = arith.constant 0 : i32
    return %c0_i32, %arg1 : i32, i32
  }
  func.func @transform_1(%arg0: i32, %arg1: i32) -> (i32, i32) {
    %c0_i32 = arith.constant 0 : i32
    %c0_i32_0 = arith.constant 0 : i32
    return %arg0, %c0_i32 : i32, i32
  }
  func.func @transform_2(%arg0: i32, %arg1: i32) -> (i32, i32) {
    %c0_i32 = arith.constant 0 : i32
    %c0_i32_0 = arith.constant 0 : i32
    return %arg0, %c0_i32 : i32, i32
  }
  func.func @transform_3(%arg0: i32, %arg1: i32) -> (i32, i32) {
    %c0_i32 = arith.constant 0 : i32
    %c0_i32_0 = arith.constant 0 : i32
    return %arg0, %c0_i32 : i32, i32
  }
  func.func @transform_4(%arg0: i32, %arg1: i32) -> (i32, i32) {
    %c0_i32 = arith.constant 0 : i32
    %c0_i32_0 = arith.constant 0 : i32
    return %arg0, %c0_i32 : i32, i32
  }
}

</mosaic_0001>

<llo_original>
// kernel: tpu_custom_call.1
$region0: #{tpu_custom_call.1}
  #allocation0 [shape = 'u32[]', space=smem, size = 0x4, offset = 0x4, fixed_abs, tag = 'smem constant byte address 0x4 - core index']
  #allocation1 [shape = 'u32[144,128]{1,0:T(1,128)}', space=vmem, size = 0x12000, scoped, tag = 'internal scratch']
  #allocation2 [shape = 'f32[8,1]{1,0:T(8,128)}', space=vmem, size = 0x1000, scoped, tag = 'scratch operand']
  #allocation3 [shape = 'f32[8,1]{1,0:T(8,128)}', space=vmem, size = 0x1000, scoped, tag = 'scratch operand']
  %s0 = inlined_call_operand.hbm [shape: f32[40,256], index: 0, kind: input, shape index: {}]
  %s1 = inlined_call_operand.vmem [shape: f32[8,40], index: 1, kind: input, shape index: {}]
  %s2 = inlined_call_operand.vmem [shape: f32[8,1], index: 2, kind: input, shape index: {}]
  %s3 = inlined_call_operand.vmem [shape: f32[8,1], index: 3, kind: input, shape index: {}]
  %s4 = inlined_call_operand.hbm [shape: f32[8,256], index: 4, kind: output, shape index: {}]
  %s5 = sld [smem:[#allocation0]]
  $region38: #{tpu_custom_call.1} parent=0
    _
  %s7 = ssub.s32 1, %s5
  %s8 = scalar_select 0, %s7, %s5
  $region1: #{tpu_custom_call.1} parent=0
    #allocation4 [shape = 'u8[40960]{0}', space=vmem, size = 0xa000, scoped, tag = 'input window, operand 0, single buffered']
    #allocation5 [shape = 's32[1]{0}', space=sflag, size = 0x4, scoped, tag = 'scoped memory for tpu_custom_call.1']
    #allocation6 [shape = 's32[1]{0}', space=sflag, size = 0x4, scoped, tag = 'scoped memory for tpu_custom_call.1']
    #allocation7 [shape = 'u8[8192]{0}', space=vmem, size = 0x2000, scoped, tag = 'output window, operand 0, single buffered']
    %9 = vsyncpa [#allocation5], 0
    %10 = vsyncpa [#allocation6], 0
    // Predicated region
    $region2: #{tpu_custom_call.1} parent=1 // pred_check
      _
    $region3: #{tpu_custom_call.1} parent=1 // pred_check_branch
      %12 = sbr.rel (0) target = $region5
    $region4: #{tpu_custom_call.1} parent=1 // pred_region
      %s14 = ssub.s32 1280, 1280
      %15 = vsyncadd [#allocation5], %s14
      %s16 = sshll.u32 [#allocation4], 4
      %s17 = int_to_ptr.vmem [resolvable:$true] %s16
      %22 = dma.hbm_to_vmem [thread:$0]  %s0, 1280, %s17, [#allocation5], 256, 256, 16
    $region5: #{tpu_custom_call.1} parent=1 // pred_fallthru
      _
    // Predicated region
    $region6: #{tpu_custom_call.1} parent=1 // pred_check
      _
    $region7: #{tpu_custom_call.1} parent=1 // pred_check_branch
      %24 = sbr.rel (0) target = $region9
    $region8: #{tpu_custom_call.1} parent=1 // pred_region
      _
    $region9: #{tpu_custom_call.1} parent=1 // pred_fallthru
      _
    // Predicated region
    $region10: #{tpu_custom_call.1} parent=1 // pred_check
      _
    $region11: #{tpu_custom_call.1} parent=1 // pred_check_branch
      %26 = sbr.rel (0) target = $region13
    $region12: #{tpu_custom_call.1} parent=1 // pred_region
      _
    $region13: #{tpu_custom_call.1} parent=1 // pred_fallthru
      _
    // Predicated region
    $region14: #{tpu_custom_call.1} parent=1 // pred_check
      _
    $region15: #{tpu_custom_call.1} parent=1 // pred_check_branch
      %28 = sbr.rel (0) target = $region17
    $region16: #{tpu_custom_call.1} parent=1 // pred_region
      _
    $region17: #{tpu_custom_call.1} parent=1 // pred_fallthru
      _
    // Predicated region
    $region18: #{tpu_custom_call.1} parent=1 // pred_check
      _
    $region19: #{tpu_custom_call.1} parent=1 // pred_check_branch
      %30 = sbr.rel (0) target = $region21
    $region20: #{tpu_custom_call.1} parent=1 // pred_region
      %31 = dma.done [#allocation5], 1280
    $region21: #{tpu_custom_call.1} parent=1 // pred_fallthru
      _
    %s32 = smul.u32 0, 256
    %p33 = scmp.eq.s32.totalorder 0, 0
    // Predicated region
    $region22: #{tpu_custom_call.1} parent=1 // pred_check
      %p34 = pneg %p33
    $region23: #{tpu_custom_call.1} parent=1 // pred_check_branch
      %36 = sbr.rel (%p34) target = $region25
    $region24: #{tpu_custom_call.1} parent=1 // pred_region
      %vm37 = vcmask 7168
      %38 = vst.msk [vmem:[#allocation2] sm:$0xff] %vm37, 0.0
      %39 = vst.msk [vmem:[#allocation3] sm:$0xff] %vm37, 0.0
    $region25: #{tpu_custom_call.1} parent=1 // pred_fallthru
      _
    %v40 = vld [vmem:[%s1] sm:$0xff]
    %v41 = vld [vmem:[#allocation4] sm:$0xff]
    %v42 = vld [vmem:[#allocation4 + $0x8] sm:$0xff]
    %v43 = vld [vmem:[#allocation4 + $0x10] sm:$0xff]
    %v44 = vld [vmem:[#allocation4 + $0x18] sm:$0xff]
    %v45 = vld [vmem:[#allocation4 + $0x20] sm:$0xff]
    %v46 = vld [vmem:[#allocation4 + $0x28] sm:$0xff]
    %v47 = vld [vmem:[#allocation4 + $0x30] sm:$0xff]
    %v48 = vld [vmem:[#allocation4 + $0x38] sm:$0xff]
    %v49 = vld [vmem:[#allocation4 + $0x40] sm:$0xff]
    %v50 = vld [vmem:[#allocation4 + $0x48] sm:$0xff]
    %vm51 = vcmask 326656
    %v53 = vsel %vm51, %v40, 0
    %55 = vmatprep.subr.mxu0 %v42
    %56 = vmatpush1.msra.mxu0 %v41
    %57 = vmatprep.subr.mxu0 %v44
    %58 = vmatpush1.msra.mxu0 %v43
    %59 = vmatprep.subr.mxu0 %v46
    %60 = vmatpush1.msra.mxu0 %v45
    %61 = vmatprep.subr.mxu0 %v48
    %62 = vmatpush1.msra.mxu0 %v47
    %63 = vmatprep.subr.mxu0 %v50
    %64 = vmatpush1.msra.mxu0 %v49
    %65 = vmatprep.subr.mxu0 0.0
    %66 = vmatpush1.msra.mxu0 0.0
    %67 = vmatprep.subr.mxu0 0.0
    %68 = vmatpush1.msra.mxu0 0.0
    %69 = vmatprep.subr.mxu0 0.0
    %70 = vmatpush1.msra.mxu0 0.0
    %71 = vmatprep.subr.mxu0 0.0
    %72 = vmatpush1.msra.mxu0 0.0
    %73 = vmatprep.subr.mxu0 0.0
    %74 = vmatpush1.msra.mxu0 0.0
    %75 = vmatprep.subr.mxu0 0.0
    %76 = vmatpush1.msra.mxu0 0.0
    %77 = vmatprep.subr.mxu0 0.0
    %78 = vmatpush1.msra.mxu0 0.0
    %79 = vmatprep.subr.mxu0 0.0
    %80 = vmatpush1.msra.mxu0 0.0
    %81 = vmatprep.subr.mxu0 0.0
    %82 = vmatpush1.msra.mxu0 0.0
    %83 = vmatprep.subr.mxu0 0.0
    %84 = vmatpush1.msra.mxu0 0.0
    %85 = vmatprep.subr.mxu0 0.0
    %86 = vmatpush1.msra.mxu0 0.0
    %87 = vmatprep.subr.mxu0 0.0
    %88 = vmatpush1.msra.mxu0 0.0
    %89 = vmatprep.subr.mxu0 0.0
    %90 = vmatpush1.msra.mxu0 0.0
    %91 = vmatprep.subr.mxu0 0.0
    %92 = vmatpush1.msra.mxu0 0.0
    %93 = vmatprep.subr.mxu0 0.0
    %94 = vmatpush1.msra.mxu0 0.0
    %95 = vmatprep.subr.mxu0 0.0
    %96 = vmatpush1.msra.mxu0 0.0
    %97 = vmatprep.subr.mxu0 0.0
    %98 = vmatpush1.msra.mxu0 0.0
    %99 = vmatprep.subr.mxu0 0.0
    %100 = vmatpush1.msra.mxu0 0.0
    %101 = vmatprep.subr.mxu0 0.0
    %102 = vmatpush1.msra.mxu0 0.0
    %103 = vmatprep.subr.mxu0 0.0
    %104 = vmatpush1.msra.mxu0 0.0
    %105 = vmatprep.subr.mxu0 0.0
    %106 = vmatpush1.msra.mxu0 0.0
    %107 = vmatprep.subr.mxu0 0.0
    %108 = vmatpush1.msra.mxu0 0.0
    %109 = vmatprep.subr.mxu0 0.0
    %110 = vmatpush1.msra.mxu0 0.0
    %111 = vmatprep.subr.mxu0 0.0
    %112 = vmatpush1.msra.mxu0 0.0
    %113 = vmatprep.subr.mxu0 0.0
    %114 = vmatpush1.msra.mxu0 0.0
    %115 = vmatprep.subr.mxu0 0.0
    %116 = vmatpush1.msra.mxu0 0.0
    %117 = vmatprep.subr.mxu0 0.0
    %118 = vmatpush1.msra.mxu0 0.0
    %119 = vmatprep.mubr.f32.mxu0 0.0
    %120 = vmatmul.mubr.f32.gmra.mrb[0].mxu0 %v53
    %v121 = vpop.f32.mrb[0].mxu0
    %v122 = vadd.f32 0.0, %v121
    %v123 = vpop.f32.mrb[0].mxu0
    %v124 = vadd.f32 0.0, %v123
    %125 = vdwg.mxu0
    %s126 = sshra.s32 %s32, 7
    %s127 = sand.u32 %s32, 127
    %s128 = smul.addr %s126, 8
    %s129 = scalar_lea.vmem [#allocation7], %s128
    %130 = vst [vmem:[%s129] sm:$0xff] %v122
    %131 = vst [vmem:[%s129 + $0x8] sm:$0xff] %v124
    %v132 = vld [vmem:[#allocation2] sm:$0xff]
    %v133 = vadd.f32 %v122, %v124
    %134 = vadd.xlane.f32.xlu0 %v133
    %v135 = vpop.xlane.xlu0 %134
    %v136 = vadd.f32 %v132, %v135
    %vm137 = vcmask 7168
    %138 = vst.msk [vmem:[#allocation2] sm:$0xff] %vm137, %v136
    %v139 = vld [vmem:[#allocation3] sm:$0xff]
    %v140 = vmul.f32 %v122, %v122
    %v141 = vmul.f32 %v124, %v124
    %v142 = vadd.f32 %v140, %v141
    %143 = vadd.xlane.f32.xlu0 %v142
    %v144 = vpop.xlane.xlu0 %143
    %v145 = vadd.f32 %v139, %v144
    %146 = vst.msk [vmem:[#allocation3] sm:$0xff] %vm137, %v145
    // Predicated region
    $region26: #{tpu_custom_call.1} parent=1 // pred_check
      %p147 = pneg %p33
    $region27: #{tpu_custom_call.1} parent=1 // pred_check_branch
      %149 = sbr.rel (%p147) target = $region29
    $region28: #{tpu_custom_call.1} parent=1 // pred_region
      %v150 = vld [vmem:[#allocation2] sm:$0xff]
      %v151 = vmul.f32 %v150, 0.00390625
      %v152 = vld [vmem:[#allocation3] sm:$0xff]
      %v153 = vmul.f32 %v152, 0.00390625
      %v154 = vmul.f32 %v151, %v151
      %v155 = vsub.f32 %v153, %v154
      %v156 = vadd.f32 %v155, 1e-05
      %v157 = vrsqrt.pop %v156
      %v158 = vld [vmem:[%s2] sm:$0xff]
      %v159 = vmul.f32 %v157, %v158
      %v160 = vld [vmem:[%s3] sm:$0xff]
      %v161 = vmul.f32 %v151, %v159
      %v162 = vsub.f32 %v160, %v161
      %v163 = vld [vmem:[#allocation7] sm:$0xff]
      %v164 = vld [vmem:[#allocation7 + $0x8] sm:$0xff]
      %166 = vset.pattern.permute.xlu0 0
      %167 = vperm.xlu0 %166, %v159
      %v168 = vpop.permute.xlu0 %167
      %v170 = vmul.f32 %v163, %v168
      %v171 = vmul.f32 %v164, %v168
      %173 = vset.pattern.permute.xlu0 0
      %174 = vperm.xlu0 %173, %v162
      %v175 = vpop.permute.xlu0 %174
      %v177 = vadd.f32 %v170, %v175
      %v178 = vadd.f32 %v171, %v175
      %v179 = vmax.f32 %v177, 0.0
      %v180 = vmax.f32 %v178, 0.0
      %181 = vst [vmem:[#allocation7] sm:$0xff] %v179
      %182 = vst [vmem:[#allocation7 + $0x8] sm:$0xff] %v180
    $region29: #{tpu_custom_call.1} parent=1 // pred_fallthru
      _
    // Predicated region
    $region30: #{tpu_custom_call.1} parent=1 // pred_check
      _
    $region31: #{tpu_custom_call.1} parent=1 // pred_check_branch
      %184 = sbr.rel (0) target = $region33
    $region32: #{tpu_custom_call.1} parent=1 // pred_region
      %s186 = ssub.s32 256, 256
      %187 = vsyncadd [#allocation6], %s186
      %s189 = sshll.u32 [#allocation7], 4
      %s190 = int_to_ptr.vmem [resolvable:$true] %s189
      %192 = dma.vmem_to_hbm [thread:$0]  %s190, 256, %s4, [#allocation6]
    $region33: #{tpu_custom_call.1} parent=1 // pred_fallthru
      _
    // Predicated region
    $region34: #{tpu_custom_call.1} parent=1 // pred_check
      _
    $region35: #{tpu_custom_call.1} parent=1 // pred_check_branch
      %194 = sbr.rel (0) target = $region37
    $region36: #{tpu_custom_call.1} parent=1 // pred_region
      %195 = dma.done [#allocation6], 256
    $region37: #{tpu_custom_call.1} parent=1 // pred_fallthru
      _
    %196 = vsyncpa [#allocation5], 1
    %197 = vsyncpa [#allocation6], 1

</llo_original>
